<compile_context>
chip_gen: v5e
topology: v5e:2x2
jax: 0.10.0
libtpu: 0.0.40
codegen_flags: <defaults>
</compile_context>

<pallas_src>
import functools

import jax
import jax.numpy as jnp
from jax.experimental import pallas as pl
from jax.experimental.pallas import tpu as pltpu


# ----------------------------------------------------------------------------
# Kernels
# ----------------------------------------------------------------------------
def _softargmax_single_kernel(x_ref, g_ref, o_ref, *, beta, n_coords):
    # Single tile over N (n_k == 1): plain softmax, no online-softmax scratch.
    # x_ref: (bb, C, N)   g_ref: (G, N) shared or (bb, G, N) per-batch
    # o_ref: (bb, C, G)
    s = beta * x_ref[...].astype(jnp.float32)
    s = s - jnp.max(s, axis=-1, keepdims=True)
    e = jnp.exp(s)                                            # (bb, C, N)
    g = g_ref[...].astype(jnp.float32)
    inv = pl.reciprocal(jnp.sum(e, axis=-1, keepdims=True), approx=False)
    for gi in range(n_coords):                                # VPU mul + lane reduce
        num = jnp.sum(e * g[..., gi:gi + 1, :], axis=-1, keepdims=True)
        o_ref[:, :, gi:gi + 1] = (num * inv).astype(o_ref.dtype)


def _softargmax_tiled_kernel(x_ref, g_ref, o_ref, m_sc, acc_sc, *,
                             beta, n_total, tile_n, n_coords):
    # Online softmax over N tiles (reduction axis is the last grid axis).
    # x_ref: (bb, C, tn)   g_ref: (G, tn) shared or (bb, G, tn) per-batch
    # o_ref: (bb, C, G)
    # scratch: m_sc (bb, C, 1) running max
    #          acc_sc (bb, C, G+1): columns 0..G-1 = unnormalized numerators,
    #                               column G = softmax denominator (folded in).
    k = pl.program_id(1)

    @pl.when(k == 0)
    def _():
        m_sc[...] = jnp.full(m_sc.shape, -jnp.inf, dtype=m_sc.dtype)
        acc_sc[...] = jnp.zeros(acc_sc.shape, dtype=acc_sc.dtype)

    s = beta * x_ref[...].astype(jnp.float32)                 # (bb, C, tn)
    g = g_ref[...].astype(jnp.float32)
    if n_total % tile_n != 0:
        # Ragged last tile: mask lanes past the true N in x (-> e == 0) and zero
        # them in the grid so 0 * garbage can never produce NaN/Inf.
        col = jax.lax.broadcasted_iota(jnp.int32, s.shape, s.ndim - 1)
        s = jnp.where(k * tile_n + col < n_total, s, -jnp.inf)
        gcol = jax.lax.broadcasted_iota(jnp.int32, g.shape, g.ndim - 1)
        g = jnp.where(k * tile_n + gcol < n_total, g, 0.0)

    m_prev = m_sc[...]                                        # (bb, C, 1)
    m_new = jnp.maximum(m_prev, jnp.max(s, axis=-1, keepdims=True))
    alpha = jnp.exp(m_prev - m_new)                           # 0 at k == 0
    e = jnp.exp(s - m_new)                                    # (bb, C, tn)
    m_sc[...] = m_new

    # Denominator rides along as column G of the accumulator.
    acc_sc[:, :, n_coords:n_coords + 1] = (
        alpha * acc_sc[:, :, n_coords:n_coords + 1]
        + jnp.sum(e, axis=-1, keepdims=True))
    for gi in range(n_coords):                                # VPU mul + lane reduce
        w = jnp.sum(e * g[..., gi:gi + 1, :], axis=-1, keepdims=True)
        acc_sc[:, :, gi:gi + 1] = alpha * acc_sc[:, :, gi:gi + 1] + w

    @pl.when(k == pl.num_programs(1) - 1)
    def _():
        acc = acc_sc[...]                                     # (bb, C, G+1)
        inv = pl.reciprocal(acc[:, :, n_coords:n_coords + 1], approx=False)
        o_ref[...] = (acc[:, :, :n_coords] * inv).astype(o_ref.dtype)


# ----------------------------------------------------------------------------
# Wrapper helpers
# ----------------------------------------------------------------------------
def _canonicalize_grids(grids, B, N):
    """Return (G, lane_dense_grids, per_batch); lane-dense = spatial axis last."""
    if grids.ndim == 2:
        # Batch-invariant grid (the usual pose-net case: a constant meshgrid).
        if grids.shape[-1] == N:
            return grids.shape[0], grids, False               # already (G, N)
        if grids.shape[0] == N:
            return grids.shape[1], grids.T, False             # (N, G) -> (G, N), tiny
        raise ValueError(f"grid shape {grids.shape} incompatible with N={N}")
    if grids.ndim != 3 or grids.shape[0] != B:
        raise ValueError(f"grids shape {grids.shape} incompatible with B={B}, N={N}")
    if grids.shape[2] == N and grids.shape[1] != N:
        return grids.shape[1], grids, True                    # already (B, G, N)
    if grids.shape[1] != N:
        raise ValueError(f"grids shape {grids.shape} incompatible with N={N}")
    # TODO(synk): per-batch (B, N, G) grids need a one-time lane-dense transpose
    # (an HBM round-trip of grids). pose_regression_net's grid is a constant
    # meshgrid replicated over batch -- pass it as (G, N) (or grids[0].T) to hit
    # the shared-grid path and skip both this transpose and per-batch re-reads.
    return grids.shape[2], jnp.swapaxes(grids, 1, 2), True


def _pick_tile_n(N):
    # Cap the tile so the f32 temporaries (s, e, e*g) stay modest; the HBM
    # roofline saturates well below this, bigger tiles only add VMEM pressure.
    cap = 2048
    if N <= cap:
        return N                                              # single-tile path
    for tn in range(cap, 511, -128):                          # 128-aligned divisor?
        if N % tn == 0:
            return tn
    return cap                                                # ragged tail is masked


def _pick_block_b(B, C, tn, itemsize):
    budget = 4 << 20
    per_b = C * tn * (2 * itemsize + 16) + 2 * 8 * tn * 4
    bb = max(1, min(B, budget // max(per_b, 1)))
    if B >= 2:
        bb = min(bb, max(B // 2, 1))   # keep >=2 parallel steps for v7x's 2 TCs
    bb = max(bb, 1)
    while B % bb:
        bb -= 1
    return bb


def _vmem_limit_bytes(bb, C, G, tn, itemsize, per_batch):
    gb = bb if per_batch else 1
    x_tile = bb * C * tn * itemsize
    g_tile = gb * 8 * tn * max(itemsize, 4)    # sublane-padded lane-dense grid tile
    tmp = 3 * bb * C * tn * 4                  # s, e, e*g f32 temporaries
    scratch = bb * max(C, 8) * 256 * 4         # padded accumulators + output tile
    need = 2 * (x_tile + g_tile) + tmp + scratch
    try:
        cap = int(pltpu.get_tpu_info().vmem_capacity_bytes)
    except Exception:                          # older jax / query unavailable
        cap = 64 << 20
    # Leave headroom for compiler-internal scratch (esp. on 64 MiB v7x parts);
    # on 128 MiB v5e/v6e this allows well above the old flat 64 MiB cap.
    ceiling = max(cap - (16 << 20), cap // 2)
    return int(min(max(2 * need, 8 << 20), ceiling))


# ----------------------------------------------------------------------------
# Public entry point
# ----------------------------------------------------------------------------
def soft_argmax(x, grids, beta, *, tile_n=None, block_b=None):
    """SoftArgmaxLayer.forward.

    x:     (B, C, *spatial)
    grids: (B, N, G) as in the PyTorch module, or -- preferred for the usual
           batch-invariant coordinate grid -- a single (G, N) / (N, G) array.
    Returns (B, C, G) in x.dtype.
    """
    B, C = x.shape[0], x.shape[1]
    N = 1
    for d in x.shape[2:]:
        N *= d
    x_flat = x.reshape(B, C, N)
    G, g_arr, per_batch = _canonicalize_grids(grids, B, N)

    itemsize = jnp.dtype(x.dtype).itemsize
    tn = int(tile_n) if tile_n is not None else _pick_tile_n(N)
    tn = min(tn, N)
    single = tn >= N
    if single:
        tn = N
        n_k = 1
    else:
        assert tn % 128 == 0, "multi-tile tile_n must be a multiple of 128"
        n_k = (N + tn - 1) // tn
    bb = block_b if block_b is not None else _pick_block_b(B, C, tn, itemsize)
    assert B % bb == 0, (B, bb)

    vmem_limit = _vmem_limit_bytes(bb, C, G, tn, itemsize, per_batch)

    if single:
        kernel = functools.partial(_softargmax_single_kernel,
                                   beta=float(beta), n_coords=G)
        grid = (B // bb,)
        x_spec = pl.BlockSpec((bb, C, N), lambda b: (b, 0, 0))
        if per_batch:
            g_spec = pl.BlockSpec((bb, G, N), lambda b: (b, 0, 0))
        else:
            g_spec = pl.BlockSpec((G, N), lambda b: (0, 0))
        out_spec = pl.BlockSpec((bb, C, G), lambda b: (b, 0, 0))
        scratch = []
        dims = ("parallel",)
    else:
        kernel = functools.partial(_softargmax_tiled_kernel, beta=float(beta),
                                   n_total=N, tile_n=tn, n_coords=G)
        grid = (B // bb, n_k)
        x_spec = pl.BlockSpec((bb, C, tn), lambda b, k: (b, 0, k))
        if per_batch:
            g_spec = pl.BlockSpec((bb, G, tn), lambda b, k: (b, 0, k))
        else:
            g_spec = pl.BlockSpec((G, tn), lambda b, k: (0, k))
        out_spec = pl.BlockSpec((bb, C, G), lambda b, k: (b, 0, 0))
        scratch = [pltpu.VMEM((bb, C, 1), jnp.float32),        # running max
                   pltpu.VMEM((bb, C, G + 1), jnp.float32)]    # numerators + denom
        dims = ("parallel", "arbitrary")

    return pl.pallas_call(
        kernel,
        out_shape=jax.ShapeDtypeStruct((B, C, G), x.dtype),
        grid_spec=pltpu.PrefetchScalarGridSpec(
            num_scalar_prefetch=0,
            grid=grid,
            in_specs=[x_spec, g_spec],
            out_specs=out_spec,
            scratch_shapes=scratch,
        ),
        compiler_params=pltpu.CompilerParams(
            dimension_semantics=dims,
            vmem_limit_bytes=vmem_limit,
        ),
    )(x_flat, g_arr)


def soft_argmax_ref(x, grids, beta):
    """Pure-JAX reference mirroring the PyTorch code."""
    B, C = x.shape[0], x.shape[1]
    xf = x.reshape(B, C, -1, 1)
    p = jax.nn.softmax(beta * xf.astype(jnp.float32), axis=2)
    g = grids[:, None, :, :].astype(jnp.float32)   # (B, 1, N, G)
    return jnp.sum(p * g, axis=2).astype(x.dtype)  # (B, C, G)


if __name__ == "__main__":
    BETA = 100.0  # cfg.NETWORK.BETA

    # Volumetric heatmap: B=2 batches, C=4 joints, spatial 4x8x8 -> N=256, G=3.
    B, C, D, H, W = 2, 4, 4, 8, 8
    N, G = D * H * W, 3

    key = jax.random.PRNGKey(0)
    kx, kg, kx2, kg2 = jax.random.split(key, 4)
    x = jax.random.normal(kx, (B, C, D, H, W), dtype=jnp.float32)

    # The pose net's grid is a constant coordinate meshgrid, identical for every
    # batch element; the (B, N, G) tensor fed to forward() is just its broadcast.
    grid_gn = jax.random.uniform(kg, (G, N), dtype=jnp.float32,
                                 minval=-1.0, maxval=1.0)
    grids_bng = jnp.broadcast_to(jnp.swapaxes(grid_gn, 0, 1)[None], (B, N, G))

    ref = soft_argmax_ref(x, grids_bng, BETA)

    # 1) Fast path: shared lane-dense (G, N) grid, single-tile kernel (n_k == 1).
    out = jax.block_until_ready(soft_argmax(x, grid_gn, BETA))
    assert out.shape == (B, C, G), out.shape
    assert jnp.allclose(out, ref, atol=1e-4, rtol=1e-4), \
        f"max err (shared grid) = {jnp.max(jnp.abs(out - ref))}"

    # 2) Drop-in PyTorch signature: per-batch (B, N, G) grids.
    out2 = jax.block_until_ready(soft_argmax(x, grids_bng, BETA))
    assert jnp.allclose(out2, ref, atol=1e-4, rtol=1e-4), \
        f"max err (per-batch grids) = {jnp.max(jnp.abs(out2 - ref))}"

    # 3) Multi-tile online-softmax path with a clean divisor (shared grid).
    out3 = jax.block_until_ready(soft_argmax(x, grid_gn, BETA,
                                             tile_n=128, block_b=1))
    assert jnp.allclose(out3, ref, atol=1e-4, rtol=1e-4), \
        f"max err (tiled) = {jnp.max(jnp.abs(out3 - ref))}"

    # 4) Ragged last tile (N=210, not a multiple of 128), per-batch grids.
    D2, H2, W2 = 5, 6, 7
    N2 = D2 * H2 * W2
    x2 = jax.random.normal(kx2, (B, C, D2, H2, W2), dtype=jnp.float32)
    grids2 = jax.random.uniform(kg2, (B, N2, G), dtype=jnp.float32,
                                minval=-1.0, maxval=1.0)
    ref2 = soft_argmax_ref(x2, grids2, BETA)
    out4 = jax.block_until_ready(soft_argmax(x2, grids2, BETA,
                                             tile_n=128, block_b=1))
    assert jnp.allclose(out4, ref2, atol=1e-4, rtol=1e-4), \
        f"max err (ragged tiled) = {jnp.max(jnp.abs(out4 - ref2))}"

    print("KERNEL_OK")
</pallas_src>

<mosaic_0001>
module attributes {stable_mosaic.version = 11 : i64} {
  func.func @_softargmax_single_kernel(%arg0: i32, %arg1: memref<1x4x256xf32, #tpu.memory_space<vmem>>, %arg2: memref<3x256xf32, #tpu.memory_space<vmem>>, %arg3: memref<1x4x3xf32, #tpu.memory_space<vmem>>) attributes {dimension_semantics = [#tpu.dimension_semantics<parallel>], iteration_bounds = array<i64: 2>, scalar_prefetch = 0 : i64, scratch_operands = 0 : i64, tpu.core_type = #tpu.core_type<tc>, window_params = [{transform_indices = @transform_0, window_bounds = array<i64: 1, 4, 256>}, {pipeline_mode = #tpu.pipeline_mode<synchronous>, transform_indices = @transform_1, window_bounds = array<i64: 3, 256>}, {transform_indices = @transform_2, window_bounds = array<i64: 1, 4, 3>}]} {
    %c0 = arith.constant 0 : index
    %c0_0 = arith.constant 0 : index
    %c0_1 = arith.constant 0 : index
    %0 = vector.load %arg1[%c0, %c0_0, %c0_1] : memref<1x4x256xf32, #tpu.memory_space<vmem>>, vector<1x4x256xf32>
    %cst = arith.constant 1.000000e+02 : f32
    %1 = vector.broadcast %cst : f32 to vector<1x4x256xf32>
    %2 = arith.mulf %1, %0 : vector<1x4x256xf32>
    %cst_2 = arith.constant dense<0xFF800000> : vector<1x4xf32>
    %3 = vector.multi_reduction <maximumf>, %2, %cst_2 [2] : vector<1x4x256xf32> to vector<1x4xf32>
    %4 = vector.shape_cast %3 : vector<1x4xf32> to vector<1x4x1xf32>
    %5 = vector.broadcast %4 : vector<1x4x1xf32> to vector<1x4x256xf32>
    %6 = arith.subf %2, %5 : vector<1x4x256xf32>
    %7 = math.exp %6 : vector<1x4x256xf32>
    %c0_3 = arith.constant 0 : index
    %c0_4 = arith.constant 0 : index
    %8 = vector.load %arg2[%c0_3, %c0_4] : memref<3x256xf32, #tpu.memory_space<vmem>>, vector<3x256xf32>
    %cst_5 = arith.constant dense<0.000000e+00> : vector<1x4xf32>
    %9 = vector.multi_reduction <add>, %7, %cst_5 [2] : vector<1x4x256xf32> to vector<1x4xf32>
    %10 = vector.shape_cast %9 : vector<1x4xf32> to vector<1x4x1xf32>
    %11 = tpu.reciprocal %10 : vector<1x4x1xf32> -> vector<1x4x1xf32>
    %12 = vector.extract_strided_slice %8 {offsets = [0, 0], sizes = [1, 256], strides = [1, 1]} : vector<3x256xf32> to vector<1x256xf32>
    %13 = vector.shape_cast %12 : vector<1x256xf32> to vector<1x1x256xf32>
    %14 = vector.broadcast %13 : vector<1x1x256xf32> to vector<1x4x256xf32>
    %15 = arith.mulf %7, %14 : vector<1x4x256xf32>
    %cst_6 = arith.constant dense<0.000000e+00> : vector<1x4xf32>
    %16 = vector.multi_reduction <add>, %15, %cst_6 [2] : vector<1x4x256xf32> to vector<1x4xf32>
    %17 = vector.shape_cast %16 : vector<1x4xf32> to vector<1x4x1xf32>
    %18 = arith.mulf %17, %11 : vector<1x4x1xf32>
    %c0_7 = arith.constant 0 : index
    %c0_8 = arith.constant 0 : index
    %c0_9 = arith.constant 0 : index
    %19 = vector.load %arg3[%c0_7, %c0_8, %c0_9] : memref<1x4x3xf32, #tpu.memory_space<vmem>>, vector<1x4x1xf32>
    tpu.vector_store %arg3[%c0_7, %c0_8, %c0_9], %18 {strides = array<i32>} : memref<1x4x3xf32, #tpu.memory_space<vmem>>, vector<1x4x1xf32>,
    %20 = vector.extract_strided_slice %8 {offsets = [1, 0], sizes = [1, 256], strides = [1, 1]} : vector<3x256xf32> to vector<1x256xf32>
    %21 = vector.shape_cast %20 : vector<1x256xf32> to vector<1x1x256xf32>
    %22 = vector.broadcast %21 : vector<1x1x256xf32> to vector<1x4x256xf32>
    %23 = arith.mulf %7, %22 : vector<1x4x256xf32>
    %cst_10 = arith.constant dense<0.000000e+00> : vector<1x4xf32>
    %24 = vector.multi_reduction <add>, %23, %cst_10 [2] : vector<1x4x256xf32> to vector<1x4xf32>
    %25 = vector.shape_cast %24 : vector<1x4xf32> to vector<1x4x1xf32>
    %26 = arith.mulf %25, %11 : vector<1x4x1xf32>
    %c0_11 = arith.constant 0 : index
    %c0_12 = arith.constant 0 : index
    %c1 = arith.constant 1 : index
    %27 = vector.load %arg3[%c0_11, %c0_12, %c1] : memref<1x4x3xf32, #tpu.memory_space<vmem>>, vector<1x4x1xf32>
    tpu.vector_store %arg3[%c0_11, %c0_12, %c1], %26 {strides = array<i32>} : memref<1x4x3xf32, #tpu.memory_space<vmem>>, vector<1x4x1xf32>,
    %28 = vector.extract_strided_slice %8 {offsets = [2, 0], sizes = [1, 256], strides = [1, 1]} : vector<3x256xf32> to vector<1x256xf32>
    %29 = vector.shape_cast %28 : vector<1x256xf32> to vector<1x1x256xf32>
    %30 = vector.broadcast %29 : vector<1x1x256xf32> to vector<1x4x256xf32>
    %31 = arith.mulf %7, %30 : vector<1x4x256xf32>
    %cst_13 = arith.constant dense<0.000000e+00> : vector<1x4xf32>
    %32 = vector.multi_reduction <add>, %31, %cst_13 [2] : vector<1x4x256xf32> to vector<1x4xf32>
    %33 = vector.shape_cast %32 : vector<1x4xf32> to vector<1x4x1xf32>
    %34 = arith.mulf %33, %11 : vector<1x4x1xf32>
    %c0_14 = arith.constant 0 : index
    %c0_15 = arith.constant 0 : index
    %c2 = arith.constant 2 : index
    %35 = vector.load %arg3[%c0_14, %c0_15, %c2] : memref<1x4x3xf32, #tpu.memory_space<vmem>>, vector<1x4x1xf32>
    tpu.vector_store %arg3[%c0_14, %c0_15, %c2], %34 {strides = array<i32>} : memref<1x4x3xf32, #tpu.memory_space<vmem>>, vector<1x4x1xf32>,
    return
  }
  func.func @transform_0(%arg0: i32) -> (i32, i32, i32) {
    %c0_i32 = arith.constant 0 : i32
    %c0_i32_0 = arith.constant 0 : i32
    %c0_i32_1 = arith.constant 0 : i32
    return %arg0, %c0_i32, %c0_i32_0 : i32, i32, i32
  }
  func.func @transform_1(%arg0: i32) -> (i32, i32) {
    %c0_i32 = arith.constant 0 : i32
    %c0_i32_0 = arith.constant 0 : i32
    %c0_i32_1 = arith.constant 0 : i32
    return %c0_i32, %c0_i32_0 : i32, i32
  }
  func.func @transform_2(%arg0: i32) -> (i32, i32, i32) {
    %c0_i32 = arith.constant 0 : i32
    %c0_i32_0 = arith.constant 0 : i32
    %c0_i32_1 = arith.constant 0 : i32
    return %arg0, %c0_i32, %c0_i32_0 : i32, i32, i32
  }
}

</mosaic_0001>

<llo_original>
// kernel: tpu_custom_call.1
$region0: #{tpu_custom_call.1}
  #allocation0 [shape = 'u32[]', space=smem, size = 0x4, offset = 0x4, fixed_abs, tag = 'smem constant byte address 0x4 - core index']
  #allocation1 [shape = 'u32[72,128]{1,0:T(1,128)}', space=vmem, size = 0x9000, scoped, tag = 'internal scratch']
  %s0 = inlined_call_operand.hbm [shape: f32[2,4,256], index: 0, kind: input, shape index: {}]
  %s1 = inlined_call_operand.hbm [shape: f32[3,256], index: 1, kind: input, shape index: {}]
  %s2 = inlined_call_operand.vmem [shape: f32[2,4,3], index: 2, kind: output, shape index: {}]
  %s3 = sld [smem:[#allocation0]]
  $region49: #{tpu_custom_call.1} parent=0
    _
  %s5 = ssub.s32 1, %s3
  %s6 = scalar_select 0, %s5, %s3
  $region1: #{tpu_custom_call.1} parent=0
    #allocation2 [shape = 'u8[8192]{0}', space=vmem, size = 0x2000, scoped, tag = 'input window, operand 0']
    #allocation3 [shape = 's32[2]{0}', space=sflag, size = 0x8, scoped, tag = 'scoped memory for tpu_custom_call.1']
    #allocation4 [shape = 'u8[4096]{0}', space=vmem, size = 0x1000, scoped, tag = 'input window, operand 1, single buffered']
    #allocation5 [shape = 's32[1]{0}', space=sflag, size = 0x4, scoped, tag = 'scoped memory for tpu_custom_call.1']
    %7 = vsyncpa [#allocation3], 0
    %s8 = scalar_lea.sflag [#allocation3], 1
    %9 = vsyncpa %s8, 0
    %10 = vsyncpa [#allocation5], 0
    loop: start=0, step=1, limit=4
    $region2: #{tpu_custom_call.1} parent=1 // loop_pre_header
      _
    $region3: #{tpu_custom_call.1} parent=1 // loop_header
      %s12 = sphi 0, %s16
      %p13 = scmp.ge.s32.totalorder %s12, 4
      %s22 = sphi 0, %s24
      %s25 = sphi 0, %s22
      %s26 = sphi 0, %s25
      %s42 = sphi 0, %s26
      %s46 = sphi 0, %s46
      %s48 = sphi 0, %s46
      %s49 = sphi 0, %s48
      %s63 = sphi 0, %s49
      %s69 = sphi 0, %s71
      %s72 = sphi 0, %s69
      %s73 = sphi 0, %s72
      %s89 = sphi 0, %s73
    $region4: #{tpu_custom_call.1} parent=1 // loop_header_branch
      %15 = sbr.rel (%p13) target = $region8
    $region5: #{tpu_custom_call.1} parent=1 // loop_body
      %s17 = ssub.s32 %s12, 1
      %s18 = ssub.s32 %s12, 2
      %s19 = sadd.s32 %s12, 1
      %s20 = ssub.s32 %s12, %s19
      %p21 = scmp.eq.s32.totalorder %s20, 0
      %s23 = sadd.s32 %s22, 1
      %s24 = scalar_select %p21, %s22, %s23
      %p27 = pneg %p21
      %p28 = scmp.eq.s32.totalorder %s12, 1
      %p29 = por %p27, %p28
      %p30 = scmp.ne.s32.totalorder %s22, %s25
      %p31 = scmp.eq.s32.totalorder %s12, 0
      %p32 = por %p30, %p31
      %p33 = scmp.ne.s32.totalorder %s22, %s25
      %p34 = scmp.eq.s32.totalorder %s17, 1
      %p35 = por %p33, %p34
      %p36 = scmp.ne.s32.totalorder %s25, %s26
      %p37 = scmp.eq.s32.totalorder %s17, 0
      %p38 = por %p36, %p37
      %p39 = scmp.ne.s32.totalorder %s25, %s26
      %p40 = scmp.eq.s32.totalorder %s18, 1
      %p41 = por %p39, %p40
      %p43 = scmp.ne.s32.totalorder %s26, %s42
      %p44 = scmp.eq.s32.totalorder %s18, 0
      %p45 = por %p43, %p44
      %s47 = sadd.s32 %s46, 1
      %p50 = scmp.eq.s32.totalorder %s12, 1
      %p51 = scmp.ne.s32.totalorder %s46, %s48
      %p52 = scmp.eq.s32.totalorder %s12, 0
      %p53 = por %p51, %p52
      %p54 = scmp.ne.s32.totalorder %s46, %s48
      %p55 = scmp.eq.s32.totalorder %s17, 1
      %p56 = por %p54, %p55
      %p57 = scmp.ne.s32.totalorder %s48, %s49
      %p58 = scmp.eq.s32.totalorder %s17, 0
      %p59 = por %p57, %p58
      %p60 = scmp.ne.s32.totalorder %s48, %s49
      %p61 = scmp.eq.s32.totalorder %s18, 1
      %p62 = por %p60, %p61
      %p64 = scmp.ne.s32.totalorder %s49, %s63
      %p65 = scmp.eq.s32.totalorder %s18, 0
      %p66 = por %p64, %p65
      %s67 = ssub.s32 %s12, %s19
      %p68 = scmp.eq.s32.totalorder %s67, 0
      %s70 = sadd.s32 %s69, 1
      %s71 = scalar_select %p68, %s69, %s70
      %p74 = pneg %p68
      %p75 = scmp.eq.s32.totalorder %s12, 1
      %p76 = por %p74, %p75
      %p77 = scmp.ne.s32.totalorder %s69, %s72
      %p78 = scmp.eq.s32.totalorder %s12, 0
      %p79 = por %p77, %p78
      %p80 = scmp.ne.s32.totalorder %s69, %s72
      %p81 = scmp.eq.s32.totalorder %s17, 1
      %p82 = por %p80, %p81
      %p83 = scmp.ne.s32.totalorder %s72, %s73
      %p84 = scmp.eq.s32.totalorder %s17, 0
      %p85 = por %p83, %p84
      %p86 = scmp.ne.s32.totalorder %s72, %s73
      %p87 = scmp.eq.s32.totalorder %s18, 1
      %p88 = por %p86, %p87
      %p90 = scmp.ne.s32.totalorder %s73, %s89
      %p91 = scmp.eq.s32.totalorder %s18, 0
      %p92 = por %p90, %p91
      %p93 = scmp.le.s32.totalorder 1, %s12
      %p94 = scmp.lt.s32.totalorder %s12, 3
      %p95 = pnand %p93, %p94
      %p96 = pneg %p95
      // Predicated region
      $region9: #{tpu_custom_call.1} parent=5 // pred_check
        _
      $region10: #{tpu_custom_call.1} parent=5 // pred_check_branch
        %98 = sbr.rel (%p95) target = $region12
      $region11: #{tpu_custom_call.1} parent=5 // pred_region
        %s99 = ssub.s32 %s12, 1
        // Predicated region
        $region13: #{tpu_custom_call.1} parent=11 // pred_check
          %p100 = pneg %p59
        $region14: #{tpu_custom_call.1} parent=11 // pred_check_branch
          %102 = sbr.rel (%p100) target = $region16
        $region15: #{tpu_custom_call.1} parent=11 // pred_region
          %104 = vsyncadd [#allocation5], 0
          %s106 = sshll.u32 %s1, 4
          %s107 = int_to_ptr.hbm [resolvable:$true] %s106
          %s108 = sshll.u32 [#allocation4], 4
          %s109 = int_to_ptr.vmem [resolvable:$true] %s108
          %111 = dma.hbm_to_vmem [thread:$0]  %s107, 128, %s109, [#allocation5]
        $region16: #{tpu_custom_call.1} parent=11 // pred_fallthru
          _
      $region12: #{tpu_custom_call.1} parent=5 // pred_fallthru
        _
      %p112 = scmp.lt.s32.totalorder %s12, 2
      // Predicated region
      $region17: #{tpu_custom_call.1} parent=5 // pred_check
        %p113 = pneg %p112
      $region18: #{tpu_custom_call.1} parent=5 // pred_check_branch
        %115 = sbr.rel (%p113) target = $region20
      $region19: #{tpu_custom_call.1} parent=5 // pred_region
        // Predicated region
        $region21: #{tpu_custom_call.1} parent=19 // pred_check
          %p116 = pneg %p32
        $region22: #{tpu_custom_call.1} parent=19 // pred_check_branch
          %118 = sbr.rel (%p116) target = $region24
        $region23: #{tpu_custom_call.1} parent=19 // pred_region
          %s119 = sand.u32 %s22, 1
          %s120 = scalar_lea.sflag [#allocation3], %s119
          %s121 = sand.u32 %s22, 1
          %s122 = smul.addr %s121, 8
          %s123 = scalar_lea.vmem [#allocation2], %s122
          %125 = vsyncadd %s120, 0
          %s126 = smul.addr %s12, 2
          %s127 = smul.addr %s126, 4
          %s128 = scalar_lea.hbm %s0, %s127
          %s130 = sshll.u32 %s128, 4
          %s131 = int_to_ptr.hbm [resolvable:$true] %s130
          %s132 = sshll.u32 %s123, 4
          %s133 = int_to_ptr.vmem [resolvable:$true] %s132
          %135 = dma.hbm_to_vmem [thread:$0]  %s131, 128, %s133, %s120
        $region24: #{tpu_custom_call.1} parent=19 // pred_fallthru
          _
      $region20: #{tpu_custom_call.1} parent=5 // pred_fallthru
        _
      %p136 = scmp.le.s32.totalorder 1, %s12
      %p137 = scmp.lt.s32.totalorder %s12, 3
      %p138 = pnand %p136, %p137
      %p139 = pneg %p138
      // Predicated region
      $region25: #{tpu_custom_call.1} parent=5 // pred_check
        _
      $region26: #{tpu_custom_call.1} parent=5 // pred_check_branch
        %141 = sbr.rel (%p138) target = $region28
      $region27: #{tpu_custom_call.1} parent=5 // pred_region
        %s142 = ssub.s32 %s12, 1
        %s143 = sand.u32 %s25, 1
        %s144 = scalar_lea.sflag [#allocation3], %s143
        %s145 = sand.u32 %s25, 1
        %s146 = smul.addr %s145, 8
        %s147 = scalar_lea.vmem [#allocation2], %s146
        // Predicated region
        $region29: #{tpu_custom_call.1} parent=27 // pred_check
          %p148 = pneg %p38
        $region30: #{tpu_custom_call.1} parent=27 // pred_check_branch
          %150 = sbr.rel (%p148) target = $region32
        $region31: #{tpu_custom_call.1} parent=27 // pred_region
          %152 = dma.done %s144, 128
        $region32: #{tpu_custom_call.1} parent=27 // pred_fallthru
          _
        // Predicated region
        $region33: #{tpu_custom_call.1} parent=27 // pred_check
          %p153 = pneg %p59
        $region34: #{tpu_custom_call.1} parent=27 // pred_check_branch
          %155 = sbr.rel (%p153) target = $region36
        $region35: #{tpu_custom_call.1} parent=27 // pred_region
          %157 = dma.done [#allocation5], 128
        $region36: #{tpu_custom_call.1} parent=27 // pred_fallthru
          _
        %s158 = sand.u32 %s25, 1
        %s159 = scalar_lea.sflag [#allocation3], %s158
        %s160 = sand.u32 %s25, 1
        %s161 = smul.addr %s160, 8
        %s162 = scalar_lea.vmem [#allocation2], %s161
        %p163 = pneg %p38
        %p164 = pneg %p35
        %p165 = pneg %p59
        %p166 = pneg %p56
        %p167 = pneg %p85
        %p168 = pneg %p82
        %p169 = scmp.lt.s32.totalorder %s17, 1
        %s170 = scalar_select %p169, %s17, 1
        %s171 = smul.addr %s170, 4
        %s172 = scalar_lea.vmem %s2, %s171
        %p173 = scmp.lt.s32.totalorder %s17, 1
        %s174 = scalar_select %p173, %s17, 1
        %s175 = smul.addr %s174, 4
        %s176 = scalar_lea.vmem %s2, %s175
        %v177 = vld [vmem:[%s147] sm:$0xff]
        %v178 = vmul.f32 %v177, 100.0
        %180 = vst [vmem:[#allocation1] ss:$2 sm:$0xff] %v178
        %v181 = vld.sshfl [vmem:[#allocation1] sm:$0xff pattern:$0x75316420]
        %v182 = vld.sshfl [vmem:[#allocation1 + $0x8] sm:$0xff pattern:$0x75316420]
        %vm185 = vcmask 1043456
        %v186 = vsel %vm185, %v181, -inf
        %v187 = vsel %vm185, %v182, -inf
        %v188 = vmax.f32 %v186, %v187
        %189 = vmax.xlane.f32.xlu0 %v188
        %v190 = vpop.xlane.xlu0 %189
        %v193 = vunpack.c.l.s4 839922192
        %v194 = vunpack.c.0.s8 %v193
        %v195 = vperm.slane %v190, %v194
        %v197 = vsub.f32 %v178, %v195
        %v198 = vmul.f32 %v197, 1.442695
        %v199 = vpow.pop %v198
        %v200 = vld [vmem:[#allocation4] sm:$0x77]
        %202 = vst [vmem:[#allocation1] ss:$2 sm:$0xff] %v199
        %v203 = vld.sshfl [vmem:[#allocation1] sm:$0xff pattern:$0x75316420]
        %v204 = vld.sshfl [vmem:[#allocation1 + $0x8] sm:$0xff pattern:$0x75316420]
        %v207 = vsel %vm185, %v203, 0.0
        %v208 = vsel %vm185, %v204, 0.0
        %v209 = vadd.f32 %v207, %v208
        %210 = vadd.xlane.f32.xlu0 %v209
        %v211 = vpop.xlane.xlu0 %210
        %v212 = vrcp.pop %v211
        %v213 = vmul.f32 %v211, %v212
        %v214 = vsub.f32 1.0, %v213
        %v215 = vmul.f32 %v212, %v214
        %v216 = vadd.f32 %v212, %v215
        %vm217 = vweird.f32 %v211
        %vm218 = vweird.f32 %v212
        %vm219 = vmor %vm217, %vm218
        %v220 = vsel %vm219, %v212, %v216
        %v221 = vand.u32 2147483647, %v211
        %vm222 = vcmp.eq.f32.partialorder %v221, 8.507059e+37
        %v223 = vand.u32 %v211, 2147483648
        %v224 = vor.u32 1.1754944e-38, %v223
        %v225 = vsel %vm222, %v224, %v220
        %v227 = vperm.slane %v200, 0
        %v228 = vperm.slane %v200, 4
        %v231 = vperm.slane %v227, 0
        %v232 = vperm.slane %v228, 0
        %v235 = vrot.slane %v232, 4
        %v236 = vsel %vm185, %v231, %v235
        %v238 = vmul.f32 %v199, %v236
        %240 = vst [vmem:[#allocation1] ss:$2 sm:$0xff] %v238
        %v241 = vld.sshfl [vmem:[#allocation1] sm:$0xff pattern:$0x75316420]
        %v242 = vld.sshfl [vmem:[#allocation1 + $0x8] sm:$0xff pattern:$0x75316420]
        %v245 = vsel %vm185, %v241, 0.0
        %v246 = vsel %vm185, %v242, 0.0
        %v247 = vadd.f32 %v245, %v246
        %248 = vadd.xlane.f32.xlu0 %v247
        %v249 = vpop.xlane.xlu0 %248
        %v250 = vmul.f32 %v249, %v225
        %vm251 = vcmask 3072
        %252 = vst.msk [vmem:[%s176] sm:$0xf] %vm251, %v250
        %v253 = vperm.slane %v200, 1
        %v254 = vperm.slane %v200, 5
        %v257 = vperm.slane %v253, 1
        %v258 = vperm.slane %v254, 1
        %v261 = vrot.slane %v258, 4
        %v262 = vsel %vm185, %v257, %v261
        %v264 = vmul.f32 %v199, %v262
        %266 = vst [vmem:[#allocation1] ss:$2 sm:$0xff] %v264
        %v267 = vld.sshfl [vmem:[#allocation1] sm:$0xff pattern:$0x75316420]
        %v268 = vld.sshfl [vmem:[#allocation1 + $0x8] sm:$0xff pattern:$0x75316420]
        %v271 = vsel %vm185, %v267, 0.0
        %v272 = vsel %vm185, %v268, 0.0
        %v273 = vadd.f32 %v271, %v272
        %274 = vadd.xlane.f32.xlu0 %v273
        %v275 = vpop.xlane.xlu0 %274
        %v276 = vmul.f32 %v275, %v225
        %vm277 = vcmask 11272
        %278 = vst.msk [vmem:[%s176] sm:$0xf] %vm277, %v276
        %v279 = vperm.slane %v200, 2
        %v280 = vperm.slane %v200, 6
        %v283 = vperm.slane %v279, 2
        %v284 = vperm.slane %v280, 2
        %v287 = vrot.slane %v284, 4
        %v288 = vsel %vm185, %v283, %v287
        %v290 = vmul.f32 %v199, %v288
        %292 = vst [vmem:[#allocation1] ss:$2 sm:$0xff] %v290
        %v293 = vld.sshfl [vmem:[#allocation1] sm:$0xff pattern:$0x75316420]
        %v294 = vld.sshfl [vmem:[#allocation1 + $0x8] sm:$0xff pattern:$0x75316420]
        %v297 = vsel %vm185, %v293, 0.0
        %v298 = vsel %vm185, %v294, 0.0
        %v299 = vadd.f32 %v297, %v298
        %300 = vadd.xlane.f32.xlu0 %v299
        %v301 = vpop.xlane.xlu0 %300
        %v302 = vmul.f32 %v301, %v225
        %vm303 = vcmask 19472
        %304 = vst.msk [vmem:[%s176] sm:$0xf] %vm303, %v302
        %p305 = scmp.lt.s32.totalorder %s17, 1
        %s306 = scalar_select %p305, %s17, 1
        %s307 = smul.addr %s306, 4
        %s308 = scalar_lea.vmem %s2, %s307
        // Predicated region
        $region37: #{tpu_custom_call.1} parent=27 // pred_check
          %p309 = pneg %p82
        $region38: #{tpu_custom_call.1} parent=27 // pred_check_branch
          %311 = sbr.rel (%p309) target = $region40
        $region39: #{tpu_custom_call.1} parent=27 // pred_region
          _
        $region40: #{tpu_custom_call.1} parent=27 // pred_fallthru
          _
      $region28: #{tpu_custom_call.1} parent=5 // pred_fallthru
        _
      %p312 = scmp.le.s32.totalorder 2, %s12
      // Predicated region
      $region41: #{tpu_custom_call.1} parent=5 // pred_check
        %p313 = pneg %p312
      $region42: #{tpu_custom_call.1} parent=5 // pred_check_branch
        %315 = sbr.rel (%p313) target = $region44
      $region43: #{tpu_custom_call.1} parent=5 // pred_region
        %s316 = ssub.s32 %s12, 2
        // Predicated region
        $region45: #{tpu_custom_call.1} parent=43 // pred_check
          %p317 = pneg %p88
        $region46: #{tpu_custom_call.1} parent=43 // pred_check_branch
          %319 = sbr.rel (%p317) target = $region48
        $region47: #{tpu_custom_call.1} parent=43 // pred_region
          %p320 = scmp.lt.s32.totalorder %s18, 1
          %s321 = scalar_select %p320, %s18, 1
          %s322 = smul.addr %s321, 4
          %s323 = scalar_lea.vmem %s2, %s322
        $region48: #{tpu_custom_call.1} parent=43 // pred_fallthru
          _
      $region44: #{tpu_custom_call.1} parent=5 // pred_fallthru
        _
    $region6: #{tpu_custom_call.1} parent=1 // loop_footer
      %s16 = sadd.s32 1, %s12
    $region7: #{tpu_custom_call.1} parent=1 // loop_footer_branch
      %11 = sbr.rel target = $region3
    $region8: #{tpu_custom_call.1} parent=1 // loop_exit
      _
    %324 = vsyncpa [#allocation3], 1
    %s325 = scalar_lea.sflag [#allocation3], 1
    %326 = vsyncpa %s325, 1
    %327 = vsyncpa [#allocation5], 1

</llo_original>
